<compile_context>
chip_gen: v6e
topology: v6e:2x2x1
jax: 0.10.0
libtpu: 0.0.40
codegen_flags: <defaults>
</compile_context>

<pallas_src>
import functools

import jax
import jax.numpy as jnp
from jax.experimental import pallas as pl
from jax.experimental.pallas import tpu as pltpu


def _perm_inv_kernel(a_ref, b_ref, out_ref, *, n_im, approx_recip):
    # a_ref: (Bb, P, D)   b_ref: (Bb, Q, D)   out_ref: (Bb, 1, 128)
    a_raw = a_ref[...]
    b_raw = b_ref[...]
    bb = a_ref.shape[0]
    p = a_ref.shape[1]
    q = b_ref.shape[1]

    # |a-b|^2 = |a|^2 - 2<a,b> + |b|^2 ; fold the -2 into the MXU operand.
    b_scaled = b_raw * -2.0

    # MXU: batched contraction over the trailing feature dim of both operands
    # (same pattern as the blessed 'bqd,bkd->bqk' flash-attention contraction).
    cross = jnp.einsum("bpd,bqd->bpq", a_raw, b_scaled,
                       preferred_element_type=jnp.float32)        # (Bb, P, Q)

    a32 = a_raw.astype(jnp.float32)
    b32 = b_raw.astype(jnp.float32)
    a_sq = jnp.sum(a32 * a32, axis=-1, keepdims=True)             # (Bb, P, 1)
    b_sq = jnp.sum(b32 * b32, axis=-1)[:, None, :]                # (Bb, 1, Q)

    d2 = a_sq + cross + b_sq
    dist = jnp.sqrt(jnp.maximum(d2, 0.0))                         # cdist(a, b)

    # Stable per-axis softmin maxima:
    #   max_q softmax(-dist[p,:]) = 1 / sum_q exp(dmin_q[p] - dist[p,q])
    # Per-axis shifted exps (denominators >= 1, so the reciprocal is well
    # conditioned and no underflow-driven NaN is possible).
    dmin_q = jnp.min(dist, axis=2, keepdims=True)                 # (Bb, P, 1)
    dmin_p = jnp.min(dist, axis=1, keepdims=True)                 # (Bb, 1, Q)
    e_q = jnp.exp(dmin_q - dist)                                  # (Bb, P, Q)
    e_p = jnp.exp(dmin_p - dist)                                  # (Bb, P, Q)

    # PxQ sum reductions as matmuls-by-ones on the MXU (keeps the 2 XLUs for
    # the min reductions above).  Lane/sublane padding makes the extra
    # replicated columns/rows free.
    ones_q = jnp.ones((bb, q, 128), jnp.float32)
    ones_p = jnp.ones((bb, 8, p), jnp.float32)
    den_q = jnp.einsum("bpq,bqk->bpk", e_q, ones_q,
                       preferred_element_type=jnp.float32)        # (Bb, P, 128)
    den_p = jnp.einsum("bkp,bpq->bkq", ones_p, e_p,
                       preferred_element_type=jnp.float32)        # (Bb, 8, Q)

    best_q = pl.reciprocal(den_q, approx=approx_recip)            # (Bb, P, 128)
    best_p = pl.reciprocal(den_p, approx=approx_recip)            # (Bb, 8, Q)

    sum_q = jnp.sum(best_q, axis=1, keepdims=True)                # (Bb, 1, 128)
    sum_p = jnp.sum(best_p[:, 0:1, :], axis=2, keepdims=True)     # (Bb, 1, 1)

    loss_b = 2.0 * n_im - sum_q - sum_p                           # (Bb, 1, 128)
    out_ref[...] = loss_b.astype(out_ref.dtype)


def _round_up(x, m):
    return -(-x // m) * m


def _tpu_vmem_and_cores():
    """Returns (vmem_limit_bytes, num_tensorcores) for the local TPU gen."""
    vmem_cap = None
    try:
        info = pltpu.get_tpu_info()
        cap = getattr(info, "vmem_capacity_bytes", None)
        if cap:
            vmem_cap = int(cap)
    except Exception:
        pass
    kind = ""
    try:
        kind = jax.devices()[0].device_kind.lower()
    except Exception:
        pass
    if vmem_cap is None:
        # v7x has 64 MiB of VMEM per TensorCore; v5e/v6e have 128 MiB.
        vmem_cap = (64 << 20) if "7" in kind else (128 << 20)
    # ~25% headroom for compiler-internal scratch; never ask for the full
    # physical VMEM (v7x: ~48 MiB of 64; v5e/v6e: ~96 MiB of 128).
    vmem_limit = min(int(vmem_cap * 0.75), 100 << 20)
    num_tc = 2 if (vmem_cap <= (64 << 20) or "7" in kind) else 1
    return vmem_limit, num_tc


def perm_inv_matching_loss(im, s, *, approx_recip=True):
    B, N, D = im.shape
    Bs, M, Ds = s.shape
    assert B == Bs and D == Ds

    # Put the larger matching dim on the lane (last) axis of the PxQ tile.
    # The loss is symmetric in the two axis passes; only 2*N refers to im.
    if M >= N:
        a, b = im, s
    else:
        a, b = s, im
    P, Q = a.shape[1], b.shape[1]

    vmem_limit, num_tc = _tpu_vmem_and_cores()

    # Realistic per-batch-row VMEM footprint using tiled (8,128) layouts:
    # 5 f32 PxQ slabs (cross/d2/dist/e_q/e_p), 4 (P,128) f32, 5 (8,Q) f32,
    # the ones operand, double-buffered input windows and output block,
    # plus 30% headroom.
    itemsize = max(im.dtype.itemsize, s.dtype.itemsize)
    pq_slab = _round_up(P, 8) * _round_up(Q, 128) * 4
    p_slab = _round_up(P, 8) * 128 * 4
    q_slab = 8 * _round_up(Q, 128) * 4
    ones_q_b = _round_up(Q, 8) * 128 * 4
    in_b = 2 * itemsize * (_round_up(P, 8) + _round_up(Q, 8)) * _round_up(D, 128)
    out_b = 2 * 8 * 128 * 4
    per_b = int(1.3 * (5 * pq_slab + 4 * p_slab + 5 * q_slab
                       + ones_q_b + in_b + out_b))

    budget = int(vmem_limit * 0.75)
    bb = max(1, budget // per_b)
    bb = min(bb, B, 256)
    if num_tc > 1 and B >= 2:
        # Keep >= 2*num_tc grid steps so the "parallel" batch axis can be
        # sharded across TensorCores (v7x has 2 per chip).
        bb = min(bb, max(1, -(-B // (2 * num_tc))))
    grid = (-(-B // bb),)   # ragged last block: Pallas masks OOB rows

    kernel = functools.partial(_perm_inv_kernel, n_im=float(N),
                               approx_recip=approx_recip)

    out = pl.pallas_call(
        kernel,
        out_shape=jax.ShapeDtypeStruct((B, 1, 128), jnp.float32),
        grid_spec=pltpu.PrefetchScalarGridSpec(
            num_scalar_prefetch=0,
            grid=grid,
            in_specs=[
                pl.BlockSpec((bb, P, D), lambda i: (i, 0, 0)),
                pl.BlockSpec((bb, Q, D), lambda i: (i, 0, 0)),
            ],
            out_specs=pl.BlockSpec((bb, 1, 128), lambda i: (i, 0, 0)),
        ),
        compiler_params=pltpu.CompilerParams(
            dimension_semantics=("parallel",),
            vmem_limit_bytes=vmem_limit,
        ),
    )(a, b)

    # Per-batch losses live in lane 0; batch mean on the host.
    return jnp.mean(out[:, 0, 0])


def _reference(im, s):
    # Pure-JAX reference mirroring the PyTorch forward.
    d2 = jnp.sum((im[:, :, None, :] - s[:, None, :, :]) ** 2, axis=-1)
    dist = jnp.sqrt(d2)
    row_sum = jnp.max(jax.nn.softmax(-dist, axis=2), axis=2).sum(axis=1)
    col_sum = jnp.max(jax.nn.softmax(-dist, axis=1), axis=1).sum(axis=1)
    loss = 2.0 * dist.shape[1] - row_sum - col_sum
    return loss.mean()


if __name__ == "__main__":
    key = jax.random.PRNGKey(0)
    k1, k2 = jax.random.split(key)

    B, N, M, D = 2, 8, 8, 32
    im = jax.random.normal(k1, (B, N, D), dtype=jnp.float32)
    s = jax.random.normal(k2, (B, M, D), dtype=jnp.float32)

    loss = perm_inv_matching_loss(im, s)
    jax.block_until_ready(loss)

    ref = _reference(im, s)
    # Tolerance bounds the accumulated error of the approximate EUP
    # reciprocal (~1e-4 relative per softmin term, N+M terms per batch row).
    assert jnp.allclose(loss, ref, rtol=1e-2, atol=1e-2), (loss, ref)

    print("KERNEL_OK")
</pallas_src>

<mosaic_0001>
module attributes {stable_mosaic.version = 11 : i64} {
  func.func @_perm_inv_kernel(%arg0: i32, %arg1: memref<2x8x32xf32, #tpu.memory_space<vmem>>, %arg2: memref<2x8x32xf32, #tpu.memory_space<vmem>>, %arg3: memref<2x1x128xf32, #tpu.memory_space<vmem>>) attributes {dimension_semantics = [#tpu.dimension_semantics<parallel>], iteration_bounds = array<i64: 1>, scalar_prefetch = 0 : i64, scratch_operands = 0 : i64, tpu.core_type = #tpu.core_type<tc>, window_params = [{transform_indices = @transform_0, window_bounds = array<i64: 2, 8, 32>}, {transform_indices = @transform_1, window_bounds = array<i64: 2, 8, 32>}, {transform_indices = @transform_2, window_bounds = array<i64: 2, 1, 128>}]} {
    %c0 = arith.constant 0 : index
    %c0_0 = arith.constant 0 : index
    %c0_1 = arith.constant 0 : index
    %0 = vector.load %arg1[%c0, %c0_0, %c0_1] : memref<2x8x32xf32, #tpu.memory_space<vmem>>, vector<2x8x32xf32>
    %c0_2 = arith.constant 0 : index
    %c0_3 = arith.constant 0 : index
    %c0_4 = arith.constant 0 : index
    %1 = vector.load %arg2[%c0_2, %c0_3, %c0_4] : memref<2x8x32xf32, #tpu.memory_space<vmem>>, vector<2x8x32xf32>
    %cst = arith.constant -2.000000e+00 : f32
    %2 = vector.broadcast %cst : f32 to vector<2x8x32xf32>
    %3 = arith.mulf %1, %2 : vector<2x8x32xf32>
    "tpu.trace_start"() <{level = 10 : i32, message = "bpd,bqd->bpq"}> : () -> ()
    %cst_5 = arith.constant dense<0.000000e+00> : vector<2x8x8xf32>
    %4 = tpu.matmul %0, %3, %cst_5 {dimension_numbers = #tpu.dot_dimension_numbers<[2], [2], [1], [1], [0, 0, 0, 1, 1, 1], [0], [0]>} : vector<2x8x32xf32>, vector<2x8x32xf32>, vector<2x8x8xf32> -> vector<2x8x8xf32>
    "tpu.trace_stop"() : () -> ()
    %5 = arith.mulf %0, %0 : vector<2x8x32xf32>
    %cst_6 = arith.constant dense<0.000000e+00> : vector<2x8xf32>
    %6 = vector.multi_reduction <add>, %5, %cst_6 [2] : vector<2x8x32xf32> to vector<2x8xf32>
    %7 = vector.shape_cast %6 : vector<2x8xf32> to vector<2x8x1xf32>
    %8 = arith.mulf %1, %1 : vector<2x8x32xf32>
    %cst_7 = arith.constant dense<0.000000e+00> : vector<2x8xf32>
    %9 = vector.multi_reduction <add>, %8, %cst_7 [2] : vector<2x8x32xf32> to vector<2x8xf32>
    %10 = vector.shape_cast %9 : vector<2x8xf32> to vector<2x1x8xf32>
    %11 = vector.broadcast %7 : vector<2x8x1xf32> to vector<2x8x8xf32>
    %12 = arith.addf %11, %4 : vector<2x8x8xf32>
    %13 = vector.broadcast %10 : vector<2x1x8xf32> to vector<2x8x8xf32>
    %14 = arith.addf %12, %13 : vector<2x8x8xf32>
    %cst_8 = arith.constant 0.000000e+00 : f32
    %15 = vector.broadcast %cst_8 : f32 to vector<2x8x8xf32>
    %16 = arith.maximumf %14, %15 : vector<2x8x8xf32>
    %17 = math.sqrt %16 : vector<2x8x8xf32>
    %cst_9 = arith.constant dense<0x7F800000> : vector<2x8xf32>
    %18 = vector.multi_reduction <minimumf>, %17, %cst_9 [2] : vector<2x8x8xf32> to vector<2x8xf32>
    %19 = vector.shape_cast %18 : vector<2x8xf32> to vector<2x8x1xf32>
    %cst_10 = arith.constant dense<0x7F800000> : vector<2x8xf32>
    %20 = vector.multi_reduction <minimumf>, %17, %cst_10 [1] : vector<2x8x8xf32> to vector<2x8xf32>
    %21 = vector.shape_cast %20 : vector<2x8xf32> to vector<2x1x8xf32>
    %22 = vector.broadcast %19 : vector<2x8x1xf32> to vector<2x8x8xf32>
    %23 = arith.subf %22, %17 : vector<2x8x8xf32>
    %24 = math.exp %23 : vector<2x8x8xf32>
    %25 = vector.broadcast %21 : vector<2x1x8xf32> to vector<2x8x8xf32>
    %26 = arith.subf %25, %17 : vector<2x8x8xf32>
    %27 = math.exp %26 : vector<2x8x8xf32>
    %cst_11 = arith.constant 1.000000e+00 : f32
    %28 = vector.broadcast %cst_11 : f32 to vector<2x8x128xf32>
    %cst_12 = arith.constant 1.000000e+00 : f32
    %29 = vector.broadcast %cst_12 : f32 to vector<2x8x8xf32>
    "tpu.trace_start"() <{level = 10 : i32, message = "bpq,bqk->bpk"}> : () -> ()
    %cst_13 = arith.constant dense<0.000000e+00> : vector<2x8x128xf32>
    %30 = tpu.matmul %24, %28, %cst_13 {dimension_numbers = #tpu.dot_dimension_numbers<[2], [1], [1], [2], [0, 0, 0, 1, 1, 2], [0], [0]>} : vector<2x8x8xf32>, vector<2x8x128xf32>, vector<2x8x128xf32> -> vector<2x8x128xf32>
    "tpu.trace_stop"() : () -> ()
    "tpu.trace_start"() <{level = 10 : i32, message = "bkp,bpq->bkq"}> : () -> ()
    %cst_14 = arith.constant dense<0.000000e+00> : vector<2x8x8xf32>
    %31 = tpu.matmul %29, %27, %cst_14 {dimension_numbers = #tpu.dot_dimension_numbers<[2], [1], [1], [2], [0, 0, 0, 1, 1, 2], [0], [0]>} : vector<2x8x8xf32>, vector<2x8x8xf32>, vector<2x8x8xf32> -> vector<2x8x8xf32>
    "tpu.trace_stop"() : () -> ()
    %32 = tpu.reciprocal %30 {approx = true} : vector<2x8x128xf32> -> vector<2x8x128xf32>
    %33 = tpu.reciprocal %31 {approx = true} : vector<2x8x8xf32> -> vector<2x8x8xf32>
    %cst_15 = arith.constant dense<0.000000e+00> : vector<2x128xf32>
    %34 = vector.multi_reduction <add>, %32, %cst_15 [1] : vector<2x8x128xf32> to vector<2x128xf32>
    %35 = vector.shape_cast %34 : vector<2x128xf32> to vector<2x1x128xf32>
    %36 = vector.extract_strided_slice %33 {offsets = [0, 0, 0], sizes = [2, 1, 8], strides = [1, 1, 1]} : vector<2x8x8xf32> to vector<2x1x8xf32>
    %cst_16 = arith.constant dense<0.000000e+00> : vector<2x1xf32>
    %37 = vector.multi_reduction <add>, %36, %cst_16 [2] : vector<2x1x8xf32> to vector<2x1xf32>
    %38 = vector.shape_cast %37 : vector<2x1xf32> to vector<2x1x1xf32>
    %cst_17 = arith.constant 1.600000e+01 : f32
    %39 = vector.broadcast %cst_17 : f32 to vector<2x1x128xf32>
    %40 = arith.subf %39, %35 : vector<2x1x128xf32>
    %41 = vector.broadcast %38 : vector<2x1x1xf32> to vector<2x1x128xf32>
    %42 = arith.subf %40, %41 : vector<2x1x128xf32>
    %c0_18 = arith.constant 0 : index
    %c0_19 = arith.constant 0 : index
    %c0_20 = arith.constant 0 : index
    %43 = vector.load %arg3[%c0_18, %c0_19, %c0_20] : memref<2x1x128xf32, #tpu.memory_space<vmem>>, vector<2x1x128xf32>
    tpu.vector_store %arg3[%c0_18, %c0_19, %c0_20], %42 {strides = array<i32>} : memref<2x1x128xf32, #tpu.memory_space<vmem>>, vector<2x1x128xf32>,
    return
  }
  func.func @transform_0(%arg0: i32) -> (i32, i32, i32) {
    %c0_i32 = arith.constant 0 : i32
    %c0_i32_0 = arith.constant 0 : i32
    %c0_i32_1 = arith.constant 0 : i32
    return %arg0, %c0_i32, %c0_i32_0 : i32, i32, i32
  }
  func.func @transform_1(%arg0: i32) -> (i32, i32, i32) {
    %c0_i32 = arith.constant 0 : i32
    %c0_i32_0 = arith.constant 0 : i32
    %c0_i32_1 = arith.constant 0 : i32
    return %arg0, %c0_i32, %c0_i32_0 : i32, i32, i32
  }
  func.func @transform_2(%arg0: i32) -> (i32, i32, i32) {
    %c0_i32 = arith.constant 0 : i32
    %c0_i32_0 = arith.constant 0 : i32
    %c0_i32_1 = arith.constant 0 : i32
    return %arg0, %c0_i32, %c0_i32_0 : i32, i32, i32
  }
}

</mosaic_0001>

<llo_original>
// kernel: tpu_custom_call.1
$region0: #{tpu_custom_call.1}
  #allocation0 [shape = 'u32[]', space=smem, size = 0x4, offset = 0x4, fixed_abs, tag = 'smem constant byte address 0x4 - core index']
  #allocation1 [shape = 'u32[144,128]{1,0:T(1,128)}', space=vmem, size = 0x12000, scoped, tag = 'internal scratch']
  %s0 = inlined_call_operand.hbm [shape: f32[2,8,32], index: 0, kind: input, shape index: {}]
  %s1 = inlined_call_operand.hbm [shape: f32[2,8,32], index: 1, kind: input, shape index: {}]
  %s2 = inlined_call_operand.hbm [shape: f32[2,1,128], index: 2, kind: output, shape index: {}]
  %s3 = sld [smem:[#allocation0]]
  $region26: #{tpu_custom_call.1} parent=0
    _
  %s5 = ssub.s32 1, %s3
  %s6 = scalar_select 0, %s5, %s3
  $region1: #{tpu_custom_call.1} parent=0
    #allocation2 [shape = 'u8[8192]{0}', space=vmem, size = 0x2000, scoped, tag = 'input window, operand 0, single buffered']
    #allocation3 [shape = 's32[1]{0}', space=sflag, size = 0x4, scoped, tag = 'scoped memory for tpu_custom_call.1']
    #allocation4 [shape = 's32[1]{0}', space=sflag, size = 0x4, scoped, tag = 'scoped memory for tpu_custom_call.1']
    #allocation5 [shape = 'u8[8192]{0}', space=vmem, size = 0x2000, scoped, tag = 'input window, operand 1, single buffered']
    #allocation6 [shape = 's32[1]{0}', space=sflag, size = 0x4, scoped, tag = 'scoped memory for tpu_custom_call.1']
    #allocation7 [shape = 'u8[1024]{0}', space=vmem, size = 0x400, scoped, tag = 'output window, operand 0, single buffered']
    %7 = vsyncpa [#allocation3], 0
    %8 = vsyncpa [#allocation6], 0
    %9 = vsyncpa [#allocation4], 0
    // Predicated region
    $region2: #{tpu_custom_call.1} parent=1 // pred_check
      _
    $region3: #{tpu_custom_call.1} parent=1 // pred_check_branch
      %11 = sbr.rel (0) target = $region5
    $region4: #{tpu_custom_call.1} parent=1 // pred_region
      %s13 = ssub.s32 256, 256
      %14 = vsyncadd [#allocation3], %s13
      %s15 = sshll.u32 [#allocation2], 4
      %s16 = int_to_ptr.vmem [resolvable:$true] %s15
      %21 = dma.hbm_to_vmem [thread:$0]  %s0, 256, %s16, [#allocation3], 128, 128, 8
    $region5: #{tpu_custom_call.1} parent=1 // pred_fallthru
      _
    // Predicated region
    $region6: #{tpu_custom_call.1} parent=1 // pred_check
      _
    $region7: #{tpu_custom_call.1} parent=1 // pred_check_branch
      %23 = sbr.rel (0) target = $region9
    $region8: #{tpu_custom_call.1} parent=1 // pred_region
      %s25 = ssub.s32 256, 256
      %26 = vsyncadd [#allocation6], %s25
      %s27 = sshll.u32 [#allocation5], 4
      %s28 = int_to_ptr.vmem [resolvable:$true] %s27
      %33 = dma.hbm_to_vmem [thread:$0]  %s1, 256, %s28, [#allocation6], 128, 128, 8
    $region9: #{tpu_custom_call.1} parent=1 // pred_fallthru
      _
    // Predicated region
    $region10: #{tpu_custom_call.1} parent=1 // pred_check
      _
    $region11: #{tpu_custom_call.1} parent=1 // pred_check_branch
      %35 = sbr.rel (0) target = $region13
    $region12: #{tpu_custom_call.1} parent=1 // pred_region
      %36 = dma.done [#allocation3], 256
    $region13: #{tpu_custom_call.1} parent=1 // pred_fallthru
      _
    // Predicated region
    $region14: #{tpu_custom_call.1} parent=1 // pred_check
      _
    $region15: #{tpu_custom_call.1} parent=1 // pred_check_branch
      %38 = sbr.rel (0) target = $region17
    $region16: #{tpu_custom_call.1} parent=1 // pred_region
      %39 = dma.done [#allocation6], 256
    $region17: #{tpu_custom_call.1} parent=1 // pred_fallthru
      _
    %v40 = vld [vmem:[#allocation2] sm:$0xff]
    %v41 = vld [vmem:[#allocation2 + $0x8] sm:$0xff]
    %v42 = vld [vmem:[#allocation5] sm:$0xff]
    %v43 = vld [vmem:[#allocation5 + $0x8] sm:$0xff]
    %v44 = vmul.f32 %v42, -2.0
    %v45 = vmul.f32 %v43, -2.0
    %vm46 = vcmask 261120
    %v48 = vsel %vm46, %v40, 0
    %v51 = vsel %vm46, %v44, 0
    %53 = vmatprep.subr.mxu0 0.0
    %54 = vmatpush1.xpose.msra.mxu0 0.0
    %55 = vmatprep.subr.mxu0 0.0
    %56 = vmatpush1.xpose.msra.mxu0 0.0
    %57 = vmatprep.subr.mxu0 0.0
    %58 = vmatpush1.xpose.msra.mxu0 0.0
    %59 = vmatprep.subr.mxu0 0.0
    %60 = vmatpush1.xpose.msra.mxu0 0.0
    %61 = vmatprep.subr.mxu0 0.0
    %62 = vmatpush1.xpose.msra.mxu0 0.0
    %63 = vmatprep.subr.mxu0 0.0
    %64 = vmatpush1.xpose.msra.mxu0 0.0
    %65 = vmatprep.subr.mxu0 0.0
    %66 = vmatpush1.xpose.msra.mxu0 0.0
    %67 = vmatprep.subr.mxu0 0.0
    %68 = vmatpush1.xpose.msra.mxu0 0.0
    %69 = vmatprep.subr.mxu0 0.0
    %70 = vmatpush1.xpose.msra.mxu0 0.0
    %71 = vmatprep.subr.mxu0 0.0
    %72 = vmatpush1.xpose.msra.mxu0 0.0
    %73 = vmatprep.subr.mxu0 0.0
    %74 = vmatpush1.xpose.msra.mxu0 0.0
    %75 = vmatprep.subr.mxu0 0.0
    %76 = vmatpush1.xpose.msra.mxu0 0.0
    %77 = vmatprep.subr.mxu0 0.0
    %78 = vmatpush1.xpose.msra.mxu0 0.0
    %79 = vmatprep.subr.mxu0 0.0
    %80 = vmatpush1.xpose.msra.mxu0 0.0
    %81 = vmatprep.subr.mxu0 0.0
    %82 = vmatpush1.xpose.msra.mxu0 0.0
    %83 = vmatprep.subr.mxu0 0.0
    %84 = vmatpush1.xpose.msra.mxu0 %v51
    %85 = vmatprep.subr.mxu0 0.0
    %86 = vmatpush2.xpose.msra.mxu0 0.0
    %87 = vmatprep.subr.mxu0 0.0
    %88 = vmatpush2.xpose.msra.mxu0 0.0
    %89 = vmatprep.subr.mxu0 0.0
    %90 = vmatpush2.xpose.msra.mxu0 0.0
    %91 = vmatprep.subr.mxu0 0.0
    %92 = vmatpush2.xpose.msra.mxu0 0.0
    %93 = vmatprep.subr.mxu0 0.0
    %94 = vmatpush2.xpose.msra.mxu0 0.0
    %95 = vmatprep.subr.mxu0 0.0
    %96 = vmatpush2.xpose.msra.mxu0 0.0
    %97 = vmatprep.subr.mxu0 0.0
    %98 = vmatpush2.xpose.msra.mxu0 0.0
    %99 = vmatprep.subr.mxu0 0.0
    %100 = vmatpush2.xpose.msra.mxu0 0.0
    %101 = vmatprep.subr.mxu0 0.0
    %102 = vmatpush2.xpose.msra.mxu0 0.0
    %103 = vmatprep.subr.mxu0 0.0
    %104 = vmatpush2.xpose.msra.mxu0 0.0
    %105 = vmatprep.subr.mxu0 0.0
    %106 = vmatpush2.xpose.msra.mxu0 0.0
    %107 = vmatprep.subr.mxu0 0.0
    %108 = vmatpush2.xpose.msra.mxu0 0.0
    %109 = vmatprep.subr.mxu0 0.0
    %110 = vmatpush2.xpose.msra.mxu0 0.0
    %111 = vmatprep.subr.mxu0 0.0
    %112 = vmatpush2.xpose.msra.mxu0 0.0
    %113 = vmatprep.subr.mxu0 0.0
    %114 = vmatpush2.xpose.msra.mxu0 0.0
    %115 = vmatprep.subr.mxu0 0.0
    %116 = vmatpush2.xpose.msra.mxu0 0.0
    %117 = vmatprep.mubr.f32.mxu0 0.0
    %118 = vmatmul.mubr.f32.gmra.mxu0 %v48
    %v119 = vpop.f32.mrf.mxu0
    %v120 = vadd.f32 0.0, %v119
    %v121 = vpop.f32.mrf.mxu0
    %122 = vdwg.mxu0
    %v124 = vsel %vm46, %v41, 0
    %v127 = vsel %vm46, %v45, 0
    %129 = vmatprep.subr.mxu0 0.0
    %130 = vmatpush1.xpose.msra.mxu0 0.0
    %131 = vmatprep.subr.mxu0 0.0
    %132 = vmatpush1.xpose.msra.mxu0 0.0
    %133 = vmatprep.subr.mxu0 0.0
    %134 = vmatpush1.xpose.msra.mxu0 0.0
    %135 = vmatprep.subr.mxu0 0.0
    %136 = vmatpush1.xpose.msra.mxu0 0.0
    %137 = vmatprep.subr.mxu0 0.0
    %138 = vmatpush1.xpose.msra.mxu0 0.0
    %139 = vmatprep.subr.mxu0 0.0
    %140 = vmatpush1.xpose.msra.mxu0 0.0
    %141 = vmatprep.subr.mxu0 0.0
    %142 = vmatpush1.xpose.msra.mxu0 0.0
    %143 = vmatprep.subr.mxu0 0.0
    %144 = vmatpush1.xpose.msra.mxu0 0.0
    %145 = vmatprep.subr.mxu0 0.0
    %146 = vmatpush1.xpose.msra.mxu0 0.0
    %147 = vmatprep.subr.mxu0 0.0
    %148 = vmatpush1.xpose.msra.mxu0 0.0
    %149 = vmatprep.subr.mxu0 0.0
    %150 = vmatpush1.xpose.msra.mxu0 0.0
    %151 = vmatprep.subr.mxu0 0.0
    %152 = vmatpush1.xpose.msra.mxu0 0.0
    %153 = vmatprep.subr.mxu0 0.0
    %154 = vmatpush1.xpose.msra.mxu0 0.0
    %155 = vmatprep.subr.mxu0 0.0
    %156 = vmatpush1.xpose.msra.mxu0 0.0
    %157 = vmatprep.subr.mxu0 0.0
    %158 = vmatpush1.xpose.msra.mxu0 0.0
    %159 = vmatprep.subr.mxu0 0.0
    %160 = vmatpush1.xpose.msra.mxu0 %v127
    %161 = vmatprep.subr.mxu0 0.0
    %162 = vmatpush2.xpose.msra.mxu0 0.0
    %163 = vmatprep.subr.mxu0 0.0
    %164 = vmatpush2.xpose.msra.mxu0 0.0
    %165 = vmatprep.subr.mxu0 0.0
    %166 = vmatpush2.xpose.msra.mxu0 0.0
    %167 = vmatprep.subr.mxu0 0.0
    %168 = vmatpush2.xpose.msra.mxu0 0.0
    %169 = vmatprep.subr.mxu0 0.0
    %170 = vmatpush2.xpose.msra.mxu0 0.0
    %171 = vmatprep.subr.mxu0 0.0
    %172 = vmatpush2.xpose.msra.mxu0 0.0
    %173 = vmatprep.subr.mxu0 0.0
    %174 = vmatpush2.xpose.msra.mxu0 0.0
    %175 = vmatprep.subr.mxu0 0.0
    %176 = vmatpush2.xpose.msra.mxu0 0.0
    %177 = vmatprep.subr.mxu0 0.0
    %178 = vmatpush2.xpose.msra.mxu0 0.0
    %179 = vmatprep.subr.mxu0 0.0
    %180 = vmatpush2.xpose.msra.mxu0 0.0
    %181 = vmatprep.subr.mxu0 0.0
    %182 = vmatpush2.xpose.msra.mxu0 0.0
    %183 = vmatprep.subr.mxu0 0.0
    %184 = vmatpush2.xpose.msra.mxu0 0.0
    %185 = vmatprep.subr.mxu0 0.0
    %186 = vmatpush2.xpose.msra.mxu0 0.0
    %187 = vmatprep.subr.mxu0 0.0
    %188 = vmatpush2.xpose.msra.mxu0 0.0
    %189 = vmatprep.subr.mxu0 0.0
    %190 = vmatpush2.xpose.msra.mxu0 0.0
    %191 = vmatprep.subr.mxu0 0.0
    %192 = vmatpush2.xpose.msra.mxu0 0.0
    %193 = vmatprep.mubr.f32.mxu0 0.0
    %194 = vmatmul.mubr.f32.gmra.mxu0 %v124
    %v195 = vpop.f32.mrf.mxu0
    %v196 = vadd.f32 0.0, %v195
    %v197 = vpop.f32.mrf.mxu0
    %198 = vdwg.mxu0
    %v199 = vmul.f32 %v40, %v40
    %v200 = vmul.f32 %v41, %v41
    %v201 = vsel %vm46, %v199, 0.0
    %202 = vadd.xlane.f32.xlu0 %v201
    %v203 = vpop.xlane.xlu0 %202
    %v204 = vsel %vm46, %v200, 0.0
    %205 = vadd.xlane.f32.xlu0 %v204
    %v206 = vpop.xlane.xlu0 %205
    %v207 = vmul.f32 %v42, %v42
    %v208 = vmul.f32 %v43, %v43
    %v209 = vsel %vm46, %v207, 0.0
    %210 = vadd.xlane.f32.xlu0 %v209
    %v211 = vpop.xlane.xlu0 %210
    %v212 = vsel %vm46, %v208, 0.0
    %213 = vadd.xlane.f32.xlu0 %v212
    %v214 = vpop.xlane.xlu0 %213
    %v215 = vadd.f32 %v203, %v120
    %v216 = vadd.f32 %v206, %v196
    %v219 = vlaneseq
    %v220 = vand.u32 %v219, 127
    %v221 = vlaneseq
    %v222 = vshrl.u32 %v221, 7
    %v223 = vsub.s32 %v220, %v222
    %v224 = vrot.slane %v211, %v223
    %v225 = vlaneseq
    %v226 = vshrl.u32 %v225, 7
    %v227 = vsub.s32 %v220, %v226
    %v228 = vrot.slane %v214, %v227
    %vm229 = vcmask 1042434
    %v230 = vsel %vm229, %v224, %v224
    %vm231 = vcmask 1043459
    %v232 = vsel %vm231, %v224, %v230
    %vm233 = vcmask 1044484
    %v234 = vsel %vm233, %v224, %v232
    %vm235 = vcmask 1045509
    %v236 = vsel %vm235, %v224, %v234
    %vm237 = vcmask 1046534
    %v238 = vsel %vm237, %v224, %v236
    %vm239 = vcmask 1047559
    %v240 = vsel %vm239, %v224, %v238
    %v241 = vsel %vm229, %v228, %v228
    %v242 = vsel %vm231, %v228, %v241
    %v243 = vsel %vm233, %v228, %v242
    %v244 = vsel %vm235, %v228, %v243
    %v245 = vsel %vm237, %v228, %v244
    %v246 = vsel %vm239, %v228, %v245
    %v249 = vadd.f32 %v215, %v240
    %v250 = vadd.f32 %v216, %v246
    %v251 = vmax.f32 %v249, 0.0
    %v252 = vmax.f32 %v250, 0.0
    %v253 = vrsqrt.pop %v251
    %v254 = vmul.f32 %v251, %v253
    %vm255 = vcmp.eq.f32.partialorder %v251, inf
    %v256 = vsel %vm255, %v251, %v254
    %vm257 = vcmp.eq.f32.partialorder %v251, 0.0
    %v258 = vand.u32 %v251, 2147483648
    %v259 = vsel %vm257, %v258, %v256
    %v260 = vrsqrt.pop %v252
    %v261 = vmul.f32 %v252, %v260
    %vm262 = vcmp.eq.f32.partialorder %v252, inf
    %v263 = vsel %vm262, %v252, %v261
    %vm264 = vcmp.eq.f32.partialorder %v252, 0.0
    %v265 = vand.u32 %v252, 2147483648
    %v266 = vsel %vm264, %v265, %v263
    %vm267 = vcmask 64512
    %v268 = vsel %vm267, %v259, inf
    %269 = vmin.xlane.f32.xlu0 %v268
    %v270 = vpop.xlane.xlu0 %269
    %v271 = vsel %vm267, %v266, inf
    %272 = vmin.xlane.f32.xlu0 %v271
    %v273 = vpop.xlane.xlu0 %272
    %v274 = vrot.slane %v268, 4
    %v275 = vmin.f32 %v268, %v274
    %v276 = vrot.slane %v275, 2
    %v277 = vmin.f32 %v275, %v276
    %v278 = vrot.slane %v277, 1
    %v279 = vmin.f32 %v277, %v278
    %v280 = vrot.slane %v271, 4
    %v281 = vmin.f32 %v271, %v280
    %v282 = vrot.slane %v281, 2
    %v283 = vmin.f32 %v281, %v282
    %v284 = vrot.slane %v283, 1
    %v285 = vmin.f32 %v283, %v284
    %v286 = vsub.f32 %v270, %v259
    %v287 = vsub.f32 %v273, %v266
    %v288 = vmul.f32 %v286, 1.442695
    %v289 = vpow.pop %v288
    %v290 = vmul.f32 %v287, 1.442695
    %v291 = vpow.pop %v290
    %v292 = vsub.f32 %v279, %v259
    %v293 = vsub.f32 %v285, %v266
    %v294 = vmul.f32 %v292, 1.442695
    %v295 = vpow.pop %v294
    %v296 = vmul.f32 %v293, 1.442695
    %v297 = vpow.pop %v296
    %v299 = vsel %vm267, %v289, 0
    %301 = vmatprep.subr.mxu0 0.0
    %302 = vmatpush1.msra.mxu0 0.0
    %303 = vmatprep.subr.mxu0 0.0
    %304 = vmatpush1.msra.mxu0 0.0
    %305 = vmatprep.subr.mxu0 0.0
    %306 = vmatpush1.msra.mxu0 0.0
    %307 = vmatprep.subr.mxu0 0.0
    %308 = vmatpush1.msra.mxu0 0.0
    %309 = vmatprep.subr.mxu0 0.0
    %310 = vmatpush1.msra.mxu0 0.0
    %311 = vmatprep.subr.mxu0 0.0
    %312 = vmatpush1.msra.mxu0 0.0
    %313 = vmatprep.subr.mxu0 0.0
    %314 = vmatpush1.msra.mxu0 0.0
    %315 = vmatprep.subr.mxu0 0.0
    %316 = vmatpush1.msra.mxu0 0.0
    %317 = vmatprep.subr.mxu0 0.0
    %318 = vmatpush1.msra.mxu0 0.0
    %319 = vmatprep.subr.mxu0 0.0
    %320 = vmatpush1.msra.mxu0 0.0
    %321 = vmatprep.subr.mxu0 0.0
    %322 = vmatpush1.msra.mxu0 0.0
    %323 = vmatprep.subr.mxu0 0.0
    %324 = vmatpush1.msra.mxu0 0.0
    %325 = vmatprep.subr.mxu0 0.0
    %326 = vmatpush1.msra.mxu0 0.0
    %327 = vmatprep.subr.mxu0 0.0
    %328 = vmatpush1.msra.mxu0 0.0
    %329 = vmatprep.subr.mxu0 0.0
    %330 = vmatpush1.msra.mxu0 0.0
    %331 = vmatprep.subr.mxu0 0.0
    %332 = vmatpush1.msra.mxu0 1.0
    %333 = vmatprep.subr.mxu0 0.0
    %334 = vmatpush2.msra.mxu0 0.0
    %335 = vmatprep.subr.mxu0 0.0
    %336 = vmatpush2.msra.mxu0 0.0
    %337 = vmatprep.subr.mxu0 0.0
    %338 = vmatpush2.msra.mxu0 0.0
    %339 = vmatprep.subr.mxu0 0.0
    %340 = vmatpush2.msra.mxu0 0.0
    %341 = vmatprep.subr.mxu0 0.0
    %342 = vmatpush2.msra.mxu0 0.0
    %343 = vmatprep.subr.mxu0 0.0
    %344 = vmatpush2.msra.mxu0 0.0
    %345 = vmatprep.subr.mxu0 0.0
    %346 = vmatpush2.msra.mxu0 0.0
    %347 = vmatprep.subr.mxu0 0.0
    %348 = vmatpush2.msra.mxu0 0.0
    %349 = vmatprep.subr.mxu0 0.0
    %350 = vmatpush2.msra.mxu0 0.0
    %351 = vmatprep.subr.mxu0 0.0
    %352 = vmatpush2.msra.mxu0 0.0
    %353 = vmatprep.subr.mxu0 0.0
    %354 = vmatpush2.msra.mxu0 0.0
    %355 = vmatprep.subr.mxu0 0.0
    %356 = vmatpush2.msra.mxu0 0.0
    %357 = vmatprep.subr.mxu0 0.0
    %358 = vmatpush2.msra.mxu0 0.0
    %359 = vmatprep.subr.mxu0 0.0
    %360 = vmatpush2.msra.mxu0 0.0
    %361 = vmatprep.subr.mxu0 0.0
    %362 = vmatpush2.msra.mxu0 0.0
    %363 = vmatprep.subr.mxu0 0.0
    %364 = vmatpush2.msra.mxu0 0.0
    %365 = vmatprep.mubr.f32.mxu0 0.0
    %366 = vmatmul.mubr.f32.gmra.mxu0 %v299
    %v367 = vpop.f32.mrf.mxu0
    %v368 = vadd.f32 0.0, %v367
    %v369 = vpop.f32.mrf.mxu0
    %370 = vdwg.mxu0
    %v372 = vsel %vm267, %v291, 0
    %374 = vmatprep.subr.mxu0 0.0
    %375 = vmatpush1.msra.mxu0 0.0
    %376 = vmatprep.subr.mxu0 0.0
    %377 = vmatpush1.msra.mxu0 0.0
    %378 = vmatprep.subr.mxu0 0.0
    %379 = vmatpush1.msra.mxu0 0.0
    %380 = vmatprep.subr.mxu0 0.0
    %381 = vmatpush1.msra.mxu0 0.0
    %382 = vmatprep.subr.mxu0 0.0
    %383 = vmatpush1.msra.mxu0 0.0
    %384 = vmatprep.subr.mxu0 0.0
    %385 = vmatpush1.msra.mxu0 0.0
    %386 = vmatprep.subr.mxu0 0.0
    %387 = vmatpush1.msra.mxu0 0.0
    %388 = vmatprep.subr.mxu0 0.0
    %389 = vmatpush1.msra.mxu0 0.0
    %390 = vmatprep.subr.mxu0 0.0
    %391 = vmatpush1.msra.mxu0 0.0
    %392 = vmatprep.subr.mxu0 0.0
    %393 = vmatpush1.msra.mxu0 0.0
    %394 = vmatprep.subr.mxu0 0.0
    %395 = vmatpush1.msra.mxu0 0.0
    %396 = vmatprep.subr.mxu0 0.0
    %397 = vmatpush1.msra.mxu0 0.0
    %398 = vmatprep.subr.mxu0 0.0
    %399 = vmatpush1.msra.mxu0 0.0
    %400 = vmatprep.subr.mxu0 0.0
    %401 = vmatpush1.msra.mxu0 0.0
    %402 = vmatprep.subr.mxu0 0.0
    %403 = vmatpush1.msra.mxu0 0.0
    %404 = vmatprep.subr.mxu0 0.0
    %405 = vmatpush1.msra.mxu0 1.0
    %406 = vmatprep.subr.mxu0 0.0
    %407 = vmatpush2.msra.mxu0 0.0
    %408 = vmatprep.subr.mxu0 0.0
    %409 = vmatpush2.msra.mxu0 0.0
    %410 = vmatprep.subr.mxu0 0.0
    %411 = vmatpush2.msra.mxu0 0.0
    %412 = vmatprep.subr.mxu0 0.0
    %413 = vmatpush2.msra.mxu0 0.0
    %414 = vmatprep.subr.mxu0 0.0
    %415 = vmatpush2.msra.mxu0 0.0
    %416 = vmatprep.subr.mxu0 0.0
    %417 = vmatpush2.msra.mxu0 0.0
    %418 = vmatprep.subr.mxu0 0.0
    %419 = vmatpush2.msra.mxu0 0.0
    %420 = vmatprep.subr.mxu0 0.0
    %421 = vmatpush2.msra.mxu0 0.0
    %422 = vmatprep.subr.mxu0 0.0
    %423 = vmatpush2.msra.mxu0 0.0
    %424 = vmatprep.subr.mxu0 0.0
    %425 = vmatpush2.msra.mxu0 0.0
    %426 = vmatprep.subr.mxu0 0.0
    %427 = vmatpush2.msra.mxu0 0.0
    %428 = vmatprep.subr.mxu0 0.0
    %429 = vmatpush2.msra.mxu0 0.0
    %430 = vmatprep.subr.mxu0 0.0
    %431 = vmatpush2.msra.mxu0 0.0
    %432 = vmatprep.subr.mxu0 0.0
    %433 = vmatpush2.msra.mxu0 0.0
    %434 = vmatprep.subr.mxu0 0.0
    %435 = vmatpush2.msra.mxu0 0.0
    %436 = vmatprep.subr.mxu0 0.0
    %437 = vmatpush2.msra.mxu0 0.0
    %438 = vmatprep.mubr.f32.mxu0 0.0
    %439 = vmatmul.mubr.f32.gmra.mxu0 %v372
    %v440 = vpop.f32.mrf.mxu0
    %v441 = vadd.f32 0.0, %v440
    %v442 = vpop.f32.mrf.mxu0
    %443 = vdwg.mxu0
    %v445 = vsel %vm267, 1.0, 0
    %447 = vmatprep.subr.mxu0 0.0
    %448 = vmatpush1.msra.mxu0 0.0
    %449 = vmatprep.subr.mxu0 0.0
    %450 = vmatpush1.msra.mxu0 0.0
    %451 = vmatprep.subr.mxu0 0.0
    %452 = vmatpush1.msra.mxu0 0.0
    %453 = vmatprep.subr.mxu0 0.0
    %454 = vmatpush1.msra.mxu0 0.0
    %455 = vmatprep.subr.mxu0 0.0
    %456 = vmatpush1.msra.mxu0 0.0
    %457 = vmatprep.subr.mxu0 0.0
    %458 = vmatpush1.msra.mxu0 0.0
    %459 = vmatprep.subr.mxu0 0.0
    %460 = vmatpush1.msra.mxu0 0.0
    %461 = vmatprep.subr.mxu0 0.0
    %462 = vmatpush1.msra.mxu0 0.0
    %463 = vmatprep.subr.mxu0 0.0
    %464 = vmatpush1.msra.mxu0 0.0
    %465 = vmatprep.subr.mxu0 0.0
    %466 = vmatpush1.msra.mxu0 0.0
    %467 = vmatprep.subr.mxu0 0.0
    %468 = vmatpush1.msra.mxu0 0.0
    %469 = vmatprep.subr.mxu0 0.0
    %470 = vmatpush1.msra.mxu0 0.0
    %471 = vmatprep.subr.mxu0 0.0
    %472 = vmatpush1.msra.mxu0 0.0
    %473 = vmatprep.subr.mxu0 0.0
    %474 = vmatpush1.msra.mxu0 0.0
    %475 = vmatprep.subr.mxu0 0.0
    %476 = vmatpush1.msra.mxu0 0.0
    %477 = vmatprep.subr.mxu0 0.0
    %478 = vmatpush1.msra.mxu0 %v295
    %479 = vmatprep.subr.mxu0 0.0
    %480 = vmatpush2.msra.mxu0 0.0
    %481 = vmatprep.subr.mxu0 0.0
    %482 = vmatpush2.msra.mxu0 0.0
    %483 = vmatprep.subr.mxu0 0.0
    %484 = vmatpush2.msra.mxu0 0.0
    %485 = vmatprep.subr.mxu0 0.0
    %486 = vmatpush2.msra.mxu0 0.0
    %487 = vmatprep.subr.mxu0 0.0
    %488 = vmatpush2.msra.mxu0 0.0
    %489 = vmatprep.subr.mxu0 0.0
    %490 = vmatpush2.msra.mxu0 0.0
    %491 = vmatprep.subr.mxu0 0.0
    %492 = vmatpush2.msra.mxu0 0.0
    %493 = vmatprep.subr.mxu0 0.0
    %494 = vmatpush2.msra.mxu0 0.0
    %495 = vmatprep.subr.mxu0 0.0
    %496 = vmatpush2.msra.mxu0 0.0
    %497 = vmatprep.subr.mxu0 0.0
    %498 = vmatpush2.msra.mxu0 0.0
    %499 = vmatprep.subr.mxu0 0.0
    %500 = vmatpush2.msra.mxu0 0.0
    %501 = vmatprep.subr.mxu0 0.0
    %502 = vmatpush2.msra.mxu0 0.0
    %503 = vmatprep.subr.mxu0 0.0
    %504 = vmatpush2.msra.mxu0 0.0
    %505 = vmatprep.subr.mxu0 0.0
    %506 = vmatpush2.msra.mxu0 0.0
    %507 = vmatprep.subr.mxu0 0.0
    %508 = vmatpush2.msra.mxu0 0.0
    %509 = vmatprep.subr.mxu0 0.0
    %510 = vmatpush2.msra.mxu0 0.0
    %511 = vmatprep.mubr.f32.mxu0 0.0
    %512 = vmatmul.mubr.f32.gmra.mxu0 %v445
    %v513 = vpop.f32.mrf.mxu0
    %v514 = vadd.f32 0.0, %v513
    %v515 = vpop.f32.mrf.mxu0
    %516 = vdwg.mxu0
    %517 = vmatprep.subr.mxu0 0.0
    %518 = vmatpush1.msra.mxu0 0.0
    %519 = vmatprep.subr.mxu0 0.0
    %520 = vmatpush1.msra.mxu0 0.0
    %521 = vmatprep.subr.mxu0 0.0
    %522 = vmatpush1.msra.mxu0 0.0
    %523 = vmatprep.subr.mxu0 0.0
    %524 = vmatpush1.msra.mxu0 0.0
    %525 = vmatprep.subr.mxu0 0.0
    %526 = vmatpush1.msra.mxu0 0.0
    %527 = vmatprep.subr.mxu0 0.0
    %528 = vmatpush1.msra.mxu0 0.0
    %529 = vmatprep.subr.mxu0 0.0
    %530 = vmatpush1.msra.mxu0 0.0
    %531 = vmatprep.subr.mxu0 0.0
    %532 = vmatpush1.msra.mxu0 0.0
    %533 = vmatprep.subr.mxu0 0.0
    %534 = vmatpush1.msra.mxu0 0.0
    %535 = vmatprep.subr.mxu0 0.0
    %536 = vmatpush1.msra.mxu0 0.0
    %537 = vmatprep.subr.mxu0 0.0
    %538 = vmatpush1.msra.mxu0 0.0
    %539 = vmatprep.subr.mxu0 0.0
    %540 = vmatpush1.msra.mxu0 0.0
    %541 = vmatprep.subr.mxu0 0.0
    %542 = vmatpush1.msra.mxu0 0.0
    %543 = vmatprep.subr.mxu0 0.0
    %544 = vmatpush1.msra.mxu0 0.0
    %545 = vmatprep.subr.mxu0 0.0
    %546 = vmatpush1.msra.mxu0 0.0
    %547 = vmatprep.subr.mxu0 0.0
    %548 = vmatpush1.msra.mxu0 %v297
    %549 = vmatprep.subr.mxu0 0.0
    %550 = vmatpush2.msra.mxu0 0.0
    %551 = vmatprep.subr.mxu0 0.0
    %552 = vmatpush2.msra.mxu0 0.0
    %553 = vmatprep.subr.mxu0 0.0
    %554 = vmatpush2.msra.mxu0 0.0
    %555 = vmatprep.subr.mxu0 0.0
    %556 = vmatpush2.msra.mxu0 0.0
    %557 = vmatprep.subr.mxu0 0.0
    %558 = vmatpush2.msra.mxu0 0.0
    %559 = vmatprep.subr.mxu0 0.0
    %560 = vmatpush2.msra.mxu0 0.0
    %561 = vmatprep.subr.mxu0 0.0
    %562 = vmatpush2.msra.mxu0 0.0
    %563 = vmatprep.subr.mxu0 0.0
    %564 = vmatpush2.msra.mxu0 0.0
    %565 = vmatprep.subr.mxu0 0.0
    %566 = vmatpush2.msra.mxu0 0.0
    %567 = vmatprep.subr.mxu0 0.0
    %568 = vmatpush2.msra.mxu0 0.0
    %569 = vmatprep.subr.mxu0 0.0
    %570 = vmatpush2.msra.mxu0 0.0
    %571 = vmatprep.subr.mxu0 0.0
    %572 = vmatpush2.msra.mxu0 0.0
    %573 = vmatprep.subr.mxu0 0.0
    %574 = vmatpush2.msra.mxu0 0.0
    %575 = vmatprep.subr.mxu0 0.0
    %576 = vmatpush2.msra.mxu0 0.0
    %577 = vmatprep.subr.mxu0 0.0
    %578 = vmatpush2.msra.mxu0 0.0
    %579 = vmatprep.subr.mxu0 0.0
    %580 = vmatpush2.msra.mxu0 0.0
    %581 = vmatprep.mubr.f32.mxu0 0.0
    %582 = vmatmul.mubr.f32.gmra.mxu0 %v445
    %v583 = vpop.f32.mrf.mxu0
    %v584 = vadd.f32 0.0, %v583
    %v585 = vpop.f32.mrf.mxu0
    %586 = vdwg.mxu0
    %v587 = vrcp.pop %v368
    %v588 = vrcp.pop %v441
    %v589 = vrcp.pop %v514
    %v590 = vrcp.pop %v584
    %v591 = vrot.slane %v587, 4
    %v592 = vadd.f32 %v587, %v591
    %v593 = vrot.slane %v592, 2
    %v594 = vadd.f32 %v592, %v593
    %v595 = vrot.slane %v594, 1
    %v596 = vadd.f32 %v594, %v595
    %v597 = vrot.slane %v588, 4
    %v598 = vadd.f32 %v588, %v597
    %v599 = vrot.slane %v598, 2
    %v600 = vadd.f32 %v598, %v599
    %v601 = vrot.slane %v600, 1
    %v602 = vadd.f32 %v600, %v601
    %vm603 = vcmask 57344
    %v604 = vsel %vm603, %v589, 0.0
    %605 = vadd.xlane.f32.xlu0 %v604
    %v606 = vpop.xlane.xlu0 %605
    %v607 = vsel %vm603, %v590, 0.0
    %608 = vadd.xlane.f32.xlu0 %v607
    %v609 = vpop.xlane.xlu0 %608
    %v610 = vsub.f32 16.0, %v596
    %v611 = vsub.f32 16.0, %v602
    %v612 = vsub.f32 %v610, %v606
    %v613 = vsub.f32 %v611, %v609
    %614 = vst [vmem:[#allocation7] sm:$0x1] %v612
    %615 = vst [vmem:[#allocation7 + $0x1] sm:$0x1] %v613
    // Predicated region
    $region18: #{tpu_custom_call.1} parent=1 // pred_check
      _
    $region19: #{tpu_custom_call.1} parent=1 // pred_check_branch
      %617 = sbr.rel (0) target = $region21
    $region20: #{tpu_custom_call.1} parent=1 // pred_region
      %s619 = ssub.s32 32, 32
      %620 = vsyncadd [#allocation4], %s619
      %s621 = sshll.u32 [#allocation7], 4
      %s622 = int_to_ptr.vmem [resolvable:$true] %s621
      %627 = dma.vmem_to_hbm [thread:$0]  %s622, 32, %s2, [#allocation4], 16, 16, 1
    $region21: #{tpu_custom_call.1} parent=1 // pred_fallthru
      _
    // Predicated region
    $region22: #{tpu_custom_call.1} parent=1 // pred_check
      _
    $region23: #{tpu_custom_call.1} parent=1 // pred_check_branch
      %629 = sbr.rel (0) target = $region25
    $region24: #{tpu_custom_call.1} parent=1 // pred_region
      %630 = dma.done [#allocation4], 32
    $region25: #{tpu_custom_call.1} parent=1 // pred_fallthru
      _
    %631 = vsyncpa [#allocation3], 1
    %632 = vsyncpa [#allocation6], 1
    %633 = vsyncpa [#allocation4], 1

</llo_original>
